<compile_context>
chip_gen: v6e
topology: v6e:2x2x1
jax: 0.10.0
libtpu: 0.0.40
codegen_flags: <defaults>
</compile_context>

<pallas_src>
import jax
import jax.numpy as jnp
from jax.experimental import pallas as pl
from jax.experimental.pallas import tpu as pltpu

_NEG = -1e30  # finite "-inf": avoids nan from (-inf) - (-inf) in the online LSE


def _make_ce_kernel(N, C, tile_n, tile_c, num_cblk):
    need_row_mask = (N % tile_n) != 0
    need_col_mask = (C % tile_c) != 0

    def kernel(logits_ref, labels_ref, weight_ref, loss_ref, wsum_ref,
               m_sc, l_sc, picked_sc, wrow_sc):
        i = pl.program_id(0)   # row block (parallel)
        j = pl.program_id(1)   # class block (reduction, innermost)

        @pl.when(j == 0)
        def _init():
            m_sc[...] = jnp.full(m_sc.shape, _NEG, jnp.float32)
            l_sc[...] = jnp.zeros(l_sc.shape, jnp.float32)
            picked_sc[...] = jnp.zeros(picked_sc.shape, jnp.float32)
            wrow_sc[...] = jnp.zeros(wrow_sc.shape, jnp.float32)

        x = logits_ref[...].astype(jnp.float32)        # (tile_n, tile_c)
        labels = labels_ref[...]                       # (tile_n, 1) int32
        w = weight_ref[...].astype(jnp.float32)        # (1, tile_c)

        # global class index of every lane in this class block
        col = j * tile_c + jax.lax.broadcasted_iota(jnp.int32, (1, tile_c), 1)

        if need_col_mask:
            x = jnp.where(col < C, x, _NEG)
        if need_row_mask:
            row = i * tile_n + jax.lax.broadcasted_iota(jnp.int32, (tile_n, 1), 0)
            row_ok = row < N
            x = jnp.where(row_ok, x, _NEG)

        # ---- online logsumexp over class blocks ----
        m_blk = jnp.max(x, axis=-1, keepdims=True)             # (tile_n, 1)
        m_new = jnp.maximum(m_sc[...], m_blk)
        alpha = jnp.exp(m_sc[...] - m_new)
        p = jnp.exp(x - m_new)
        l_sc[...] = alpha * l_sc[...] + jnp.sum(p, axis=-1, keepdims=True)
        m_sc[...] = m_new

        # ---- one-hot gather of target logit / target class weight ----
        onehot = col == labels                                 # (tile_n, tile_c)
        if need_row_mask:
            onehot = jnp.logical_and(onehot, row_ok)
        picked_sc[...] += jnp.sum(jnp.where(onehot, x, 0.0), axis=-1, keepdims=True)
        wrow_sc[...] += jnp.sum(jnp.where(onehot, w, 0.0), axis=-1, keepdims=True)

        @pl.when(j == num_cblk - 1)
        def _finalize():
            lse = m_sc[...] + jnp.log(l_sc[...])               # (tile_n, 1)
            nll = lse - picked_sc[...]
            wl = nll * wrow_sc[...]
            # lane-dense per-row-block partials (final divide done in JAX)
            loss_ref[...] = jnp.full(loss_ref.shape, jnp.sum(wl), jnp.float32)
            wsum_ref[...] = jnp.full(wsum_ref.shape, jnp.sum(wrow_sc[...]), jnp.float32)

    return kernel


def _round_up(x, m):
    return ((x + m - 1) // m) * m


def ce_loss(ndc_out, ndc_target, ndc_weight=None, *,
            tile_n=None, tile_c=None, vmem_limit_bytes=32 * 1024 * 1024):
    """Pallas equivalent of CELoss.forward -> {'ndc': scalar_loss}."""
    N, C = ndc_out.shape

    if ndc_weight is None:
        ndc_weight = jnp.ones((C,), dtype=jnp.float32)

    labels2d = ndc_target.astype(jnp.int32).reshape(N, 1)
    weight2d = jnp.asarray(ndc_weight, dtype=jnp.float32).reshape(1, C)

    itemsize = jnp.dtype(ndc_out.dtype).itemsize

    # ---- tile selection ----------------------------------------------------
    if tile_c is None:
        # keep the whole class dim in one block while modest; tile past that
        tile_c = min(_round_up(C, 128), 2048)
    tile_c = max(128, _round_up(tile_c, 128))

    if tile_n is None:
        # ~12 MiB for the double-buffered logits stream: big enough to amortize
        # per-grid-step overhead, small enough for v7x's 64 MiB VMEM.
        budget = 12 * 1024 * 1024
        tile_n = budget // (2 * tile_c * itemsize)
        tile_n = min(tile_n, 1024, _round_up(N, 8))
    tile_n = max(8, _round_up(int(tile_n), 8))

    num_rblk = pl.cdiv(N, tile_n)
    num_cblk = pl.cdiv(C, tile_c)

    # pad the (tiny) label / weight side inputs so their blocks never read OOB;
    # the (large) logits stay unpadded and are masked in-kernel.
    N_pad, C_pad = num_rblk * tile_n, num_cblk * tile_c
    if N_pad != N:
        labels2d = jnp.pad(labels2d, ((0, N_pad - N), (0, 0)), constant_values=-1)
    if C_pad != C:
        weight2d = jnp.pad(weight2d, ((0, 0), (0, C_pad - C)))

    kernel = _make_ce_kernel(N, C, tile_n, tile_c, num_cblk)

    loss_p, wsum_p = pl.pallas_call(
        kernel,
        out_shape=(
            jax.ShapeDtypeStruct((num_rblk, 8, 128), jnp.float32),
            jax.ShapeDtypeStruct((num_rblk, 8, 128), jnp.float32),
        ),
        grid_spec=pltpu.PrefetchScalarGridSpec(
            num_scalar_prefetch=0,
            grid=(num_rblk, num_cblk),
            in_specs=[
                pl.BlockSpec((tile_n, tile_c), lambda i, j: (i, j)),  # logits
                pl.BlockSpec((tile_n, 1), lambda i, j: (i, 0)),       # labels
                pl.BlockSpec((1, tile_c), lambda i, j: (0, j)),       # class weights
            ],
            out_specs=[
                pl.BlockSpec((1, 8, 128), lambda i, j: (i, 0, 0)),    # sum w*nll per row block
                pl.BlockSpec((1, 8, 128), lambda i, j: (i, 0, 0)),    # sum w      per row block
            ],
            scratch_shapes=[
                pltpu.VMEM((tile_n, 1), jnp.float32),   # running max m
                pltpu.VMEM((tile_n, 1), jnp.float32),   # running sum-exp l
                pltpu.VMEM((tile_n, 1), jnp.float32),   # gathered target logit
                pltpu.VMEM((tile_n, 1), jnp.float32),   # gathered target weight
            ],
        ),
        compiler_params=pltpu.CompilerParams(
            dimension_semantics=("parallel", "arbitrary"),
            vmem_limit_bytes=vmem_limit_bytes,
        ),
    )(ndc_out, labels2d, weight2d)

    # tiny final reduction + divide in plain JAX (keeps row axis parallel)
    loss = jnp.sum(loss_p[:, 0, 0]) / jnp.sum(wsum_p[:, 0, 0])
    return {"ndc": loss}


def _reference_ce(logits, labels, weight):
    x = logits.astype(jnp.float32)
    lse = jax.nn.logsumexp(x, axis=-1)
    picked = jnp.take_along_axis(x, labels[:, None], axis=-1)[:, 0]
    w = weight[labels]
    return jnp.sum(w * (lse - picked)) / jnp.sum(w)


if __name__ == "__main__":
    key = jax.random.PRNGKey(0)
    k1, k2 = jax.random.split(key)

    # small shapes consistent with the module's (N, C) CrossEntropyLoss input
    N, C = 8, 32
    logits = jax.random.normal(k1, (N, C), dtype=jnp.float32)
    labels = jax.random.randint(k2, (N,), 0, C, dtype=jnp.int32)
    ndc_weight = jnp.linspace(0.5, 1.5, C, dtype=jnp.float32)  # ctor arg ndc_weight

    result = ce_loss(logits, labels, ndc_weight)
    loss = jax.block_until_ready(result["ndc"])
    ref = _reference_ce(logits, labels, ndc_weight)
    assert jnp.allclose(loss, ref, rtol=1e-5, atol=1e-5), (loss, ref)

    # unweighted path (ndc_weight=None)
    loss_u = jax.block_until_ready(ce_loss(logits, labels)["ndc"])
    ref_u = _reference_ce(logits, labels, jnp.ones((C,), jnp.float32))
    assert jnp.allclose(loss_u, ref_u, rtol=1e-5, atol=1e-5), (loss_u, ref_u)

    # exercise the multi-block path: non-divisible N and C (row + class tiling,
    # online logsumexp, in-kernel masking)
    N2, C2 = 37, 300
    k3, k4 = jax.random.split(k1)
    logits2 = jax.random.normal(k3, (N2, C2), dtype=jnp.float32)
    labels2 = jax.random.randint(k4, (N2,), 0, C2, dtype=jnp.int32)
    w2 = jnp.linspace(0.25, 2.0, C2, dtype=jnp.float32)
    loss2 = jax.block_until_ready(ce_loss(logits2, labels2, w2, tile_n=16, tile_c=128)["ndc"])
    ref2 = _reference_ce(logits2, labels2, w2)
    assert jnp.allclose(loss2, ref2, rtol=1e-5, atol=1e-5), (loss2, ref2)

    print("KERNEL_OK")
</pallas_src>

<mosaic_0001>
module attributes {stable_mosaic.version = 11 : i64} {
  func.func @kernel(%arg0: i32, %arg1: i32, %arg2: memref<8x128xf32, #tpu.memory_space<vmem>>, %arg3: memref<8x1xi32, #tpu.memory_space<vmem>>, %arg4: memref<1x128xf32, #tpu.memory_space<vmem>>, %arg5: memref<1x8x128xf32, #tpu.memory_space<vmem>>, %arg6: memref<1x8x128xf32, #tpu.memory_space<vmem>>, %arg7: memref<8x1xf32, #tpu.memory_space<vmem>>, %arg8: memref<8x1xf32, #tpu.memory_space<vmem>>, %arg9: memref<8x1xf32, #tpu.memory_space<vmem>>, %arg10: memref<8x1xf32, #tpu.memory_space<vmem>>) attributes {dimension_semantics = [#tpu.dimension_semantics<parallel>, #tpu.dimension_semantics<arbitrary>], iteration_bounds = array<i64: 1, 1>, scalar_prefetch = 0 : i64, scratch_operands = 4 : i64, tpu.core_type = #tpu.core_type<tc>, window_params = [{transform_indices = @transform_0, window_bounds = array<i64: 8, 128>}, {transform_indices = @transform_1, window_bounds = array<i64: 8, 1>}, {transform_indices = @transform_2, window_bounds = array<i64: 1, 128>}, {transform_indices = @transform_3, window_bounds = array<i64: 1, 8, 128>}, {transform_indices = @transform_4, window_bounds = array<i64: 1, 8, 128>}]} {
    %c0_i32 = arith.constant 0 : i32
    %0 = arith.cmpi eq, %arg1, %c0_i32 : i32
    %1 = arith.extui %0 : i1 to i32
    %c0_i32_0 = arith.constant 0 : i32
    %2 = arith.cmpi ne, %1, %c0_i32_0 : i32
    scf.if %2 {
      %cst_32 = arith.constant -1.000000e+30 : f32
      %55 = vector.broadcast %cst_32 : f32 to vector<8x1xf32>
      %c0_33 = arith.constant 0 : index
      %c0_34 = arith.constant 0 : index
      %56 = vector.load %arg7[%c0_33, %c0_34] : memref<8x1xf32, #tpu.memory_space<vmem>>, vector<8x1xf32>
      tpu.vector_store %arg7[%c0_33, %c0_34], %55 {strides = array<i32>} : memref<8x1xf32, #tpu.memory_space<vmem>>, vector<8x1xf32>,
      %cst_35 = arith.constant 0.000000e+00 : f32
      %57 = vector.broadcast %cst_35 : f32 to vector<8x1xf32>
      %c0_36 = arith.constant 0 : index
      %c0_37 = arith.constant 0 : index
      %58 = vector.load %arg8[%c0_36, %c0_37] : memref<8x1xf32, #tpu.memory_space<vmem>>, vector<8x1xf32>
      tpu.vector_store %arg8[%c0_36, %c0_37], %57 {strides = array<i32>} : memref<8x1xf32, #tpu.memory_space<vmem>>, vector<8x1xf32>,
      %cst_38 = arith.constant 0.000000e+00 : f32
      %59 = vector.broadcast %cst_38 : f32 to vector<8x1xf32>
      %c0_39 = arith.constant 0 : index
      %c0_40 = arith.constant 0 : index
      %60 = vector.load %arg9[%c0_39, %c0_40] : memref<8x1xf32, #tpu.memory_space<vmem>>, vector<8x1xf32>
      tpu.vector_store %arg9[%c0_39, %c0_40], %59 {strides = array<i32>} : memref<8x1xf32, #tpu.memory_space<vmem>>, vector<8x1xf32>,
      %cst_41 = arith.constant 0.000000e+00 : f32
      %61 = vector.broadcast %cst_41 : f32 to vector<8x1xf32>
      %c0_42 = arith.constant 0 : index
      %c0_43 = arith.constant 0 : index
      %62 = vector.load %arg10[%c0_42, %c0_43] : memref<8x1xf32, #tpu.memory_space<vmem>>, vector<8x1xf32>
      tpu.vector_store %arg10[%c0_42, %c0_43], %61 {strides = array<i32>} : memref<8x1xf32, #tpu.memory_space<vmem>>, vector<8x1xf32>,
    } else {
    }
    %c0 = arith.constant 0 : index
    %c0_1 = arith.constant 0 : index
    %3 = vector.load %arg2[%c0, %c0_1] : memref<8x128xf32, #tpu.memory_space<vmem>>, vector<8x128xf32>
    %c0_2 = arith.constant 0 : index
    %c0_3 = arith.constant 0 : index
    %4 = vector.load %arg3[%c0_2, %c0_3] : memref<8x1xi32, #tpu.memory_space<vmem>>, vector<8x1xi32>
    %c0_4 = arith.constant 0 : index
    %c0_5 = arith.constant 0 : index
    %5 = vector.load %arg4[%c0_4, %c0_5] : memref<1x128xf32, #tpu.memory_space<vmem>>, vector<1x128xf32>
    %c128_i32 = arith.constant 128 : i32
    %6 = arith.muli %arg1, %c128_i32 : i32
    %7 = tpu.iota {dimensions = array<i32: 1>} : vector<1x128xi32>
    %8 = vector.broadcast %6 : i32 to vector<1x128xi32>
    %9 = arith.addi %8, %7 : vector<1x128xi32>
    %c32_i32 = arith.constant 32 : i32
    %10 = vector.broadcast %c32_i32 : i32 to vector<1x128xi32>
    %11 = arith.cmpi slt, %9, %10 : vector<1x128xi32>
    %cst = arith.constant -1.000000e+30 : f32
    %12 = vector.shape_cast %11 : vector<1x128xi1> to vector<1x128xi1>
    %13 = vector.broadcast %12 : vector<1x128xi1> to vector<8x128xi1>
    %14 = vector.broadcast %cst : f32 to vector<8x128xf32>
    %15 = arith.select %13, %3, %14 : vector<8x128xi1>, vector<8x128xf32>
    %cst_6 = arith.constant dense<0xFF800000> : vector<8xf32>
    %16 = vector.multi_reduction <maximumf>, %15, %cst_6 [1] : vector<8x128xf32> to vector<8xf32>
    %17 = vector.shape_cast %16 : vector<8xf32> to vector<8x1xf32>
    %c0_7 = arith.constant 0 : index
    %c0_8 = arith.constant 0 : index
    %18 = vector.load %arg7[%c0_7, %c0_8] : memref<8x1xf32, #tpu.memory_space<vmem>>, vector<8x1xf32>
    %19 = arith.maximumf %18, %17 : vector<8x1xf32>
    %c0_9 = arith.constant 0 : index
    %c0_10 = arith.constant 0 : index
    %20 = vector.load %arg7[%c0_9, %c0_10] : memref<8x1xf32, #tpu.memory_space<vmem>>, vector<8x1xf32>
    %21 = arith.subf %20, %19 : vector<8x1xf32>
    %22 = math.exp %21 : vector<8x1xf32>
    %23 = vector.broadcast %19 : vector<8x1xf32> to vector<8x128xf32>
    %24 = arith.subf %15, %23 : vector<8x128xf32>
    %25 = math.exp %24 : vector<8x128xf32>
    %c0_11 = arith.constant 0 : index
    %c0_12 = arith.constant 0 : index
    %26 = vector.load %arg8[%c0_11, %c0_12] : memref<8x1xf32, #tpu.memory_space<vmem>>, vector<8x1xf32>
    %27 = arith.mulf %22, %26 : vector<8x1xf32>
    %cst_13 = arith.constant dense<0.000000e+00> : vector<8xf32>
    %28 = vector.multi_reduction <add>, %25, %cst_13 [1] : vector<8x128xf32> to vector<8xf32>
    %29 = vector.shape_cast %28 : vector<8xf32> to vector<8x1xf32>
    %30 = arith.addf %27, %29 : vector<8x1xf32>
    %c0_14 = arith.constant 0 : index
    %c0_15 = arith.constant 0 : index
    %31 = vector.load %arg8[%c0_14, %c0_15] : memref<8x1xf32, #tpu.memory_space<vmem>>, vector<8x1xf32>
    tpu.vector_store %arg8[%c0_14, %c0_15], %30 {strides = array<i32>} : memref<8x1xf32, #tpu.memory_space<vmem>>, vector<8x1xf32>,
    %c0_16 = arith.constant 0 : index
    %c0_17 = arith.constant 0 : index
    %32 = vector.load %arg7[%c0_16, %c0_17] : memref<8x1xf32, #tpu.memory_space<vmem>>, vector<8x1xf32>
    tpu.vector_store %arg7[%c0_16, %c0_17], %19 {strides = array<i32>} : memref<8x1xf32, #tpu.memory_space<vmem>>, vector<8x1xf32>,
    %33 = vector.broadcast %9 : vector<1x128xi32> to vector<8x128xi32>
    %34 = vector.broadcast %4 : vector<8x1xi32> to vector<8x128xi32>
    %35 = arith.cmpi eq, %33, %34 : vector<8x128xi32>
    %c0_18 = arith.constant 0 : index
    %c0_19 = arith.constant 0 : index
    %36 = vector.load %arg9[%c0_18, %c0_19] : memref<8x1xf32, #tpu.memory_space<vmem>>, vector<8x1xf32>
    %cst_20 = arith.constant 0.000000e+00 : f32
    %37 = vector.broadcast %cst_20 : f32 to vector<8x128xf32>
    %38 = arith.select %35, %15, %37 : vector<8x128xi1>, vector<8x128xf32>
    %cst_21 = arith.constant dense<0.000000e+00> : vector<8xf32>
    %39 = vector.multi_reduction <add>, %38, %cst_21 [1] : vector<8x128xf32> to vector<8xf32>
    %40 = vector.shape_cast %39 : vector<8xf32> to vector<8x1xf32>
    %41 = arith.addf %36, %40 : vector<8x1xf32>
    %c0_22 = arith.constant 0 : index
    %c0_23 = arith.constant 0 : index
    %42 = vector.load %arg9[%c0_22, %c0_23] : memref<8x1xf32, #tpu.memory_space<vmem>>, vector<8x1xf32>
    tpu.vector_store %arg9[%c0_22, %c0_23], %41 {strides = array<i32>} : memref<8x1xf32, #tpu.memory_space<vmem>>, vector<8x1xf32>,
    %c0_24 = arith.constant 0 : index
    %c0_25 = arith.constant 0 : index
    %43 = vector.load %arg10[%c0_24, %c0_25] : memref<8x1xf32, #tpu.memory_space<vmem>>, vector<8x1xf32>
    %cst_26 = arith.constant 0.000000e+00 : f32
    %44 = vector.shape_cast %5 : vector<1x128xf32> to vector<1x128xf32>
    %45 = vector.broadcast %44 : vector<1x128xf32> to vector<8x128xf32>
    %46 = vector.broadcast %cst_26 : f32 to vector<8x128xf32>
    %47 = arith.select %35, %45, %46 : vector<8x128xi1>, vector<8x128xf32>
    %cst_27 = arith.constant dense<0.000000e+00> : vector<8xf32>
    %48 = vector.multi_reduction <add>, %47, %cst_27 [1] : vector<8x128xf32> to vector<8xf32>
    %49 = vector.shape_cast %48 : vector<8xf32> to vector<8x1xf32>
    %50 = arith.addf %43, %49 : vector<8x1xf32>
    %c0_28 = arith.constant 0 : index
    %c0_29 = arith.constant 0 : index
    %51 = vector.load %arg10[%c0_28, %c0_29] : memref<8x1xf32, #tpu.memory_space<vmem>>, vector<8x1xf32>
    tpu.vector_store %arg10[%c0_28, %c0_29], %50 {strides = array<i32>} : memref<8x1xf32, #tpu.memory_space<vmem>>, vector<8x1xf32>,
    %c0_i32_30 = arith.constant 0 : i32
    %52 = arith.cmpi eq, %arg1, %c0_i32_30 : i32
    %53 = arith.extui %52 : i1 to i32
    %c0_i32_31 = arith.constant 0 : i32
    %54 = arith.cmpi ne, %53, %c0_i32_31 : i32
    scf.if %54 {
      %c0_32 = arith.constant 0 : index
      %c0_33 = arith.constant 0 : index
      %55 = vector.load %arg7[%c0_32, %c0_33] : memref<8x1xf32, #tpu.memory_space<vmem>>, vector<8x1xf32>
      %c0_34 = arith.constant 0 : index
      %c0_35 = arith.constant 0 : index
      %56 = vector.load %arg8[%c0_34, %c0_35] : memref<8x1xf32, #tpu.memory_space<vmem>>, vector<8x1xf32>
      %57 = math.log %56 : vector<8x1xf32>
      %58 = arith.addf %55, %57 : vector<8x1xf32>
      %c0_36 = arith.constant 0 : index
      %c0_37 = arith.constant 0 : index
      %59 = vector.load %arg9[%c0_36, %c0_37] : memref<8x1xf32, #tpu.memory_space<vmem>>, vector<8x1xf32>
      %60 = arith.subf %58, %59 : vector<8x1xf32>
      %c0_38 = arith.constant 0 : index
      %c0_39 = arith.constant 0 : index
      %61 = vector.load %arg10[%c0_38, %c0_39] : memref<8x1xf32, #tpu.memory_space<vmem>>, vector<8x1xf32>
      %62 = arith.mulf %60, %61 : vector<8x1xf32>
      %63 = vector.shape_cast %62 : vector<8x1xf32> to vector<1x8x1xf32>
      %cst_40 = arith.constant dense<0.000000e+00> : vector<1xf32>
      %64 = vector.multi_reduction <add>, %63, %cst_40 [1, 2] : vector<1x8x1xf32> to vector<1xf32>
      %65 = vector.shape_cast %64 : vector<1xf32> to vector<1x1x1xf32>
      %66 = vector.extract %65[0, 0, 0] : f32 from vector<1x1x1xf32>
      %67 = vector.broadcast %66 : f32 to vector<1x8x128xf32>
      %c0_41 = arith.constant 0 : index
      %c0_42 = arith.constant 0 : index
      %c0_43 = arith.constant 0 : index
      %68 = vector.load %arg5[%c0_41, %c0_42, %c0_43] : memref<1x8x128xf32, #tpu.memory_space<vmem>>, vector<1x8x128xf32>
      tpu.vector_store %arg5[%c0_41, %c0_42, %c0_43], %67 {strides = array<i32>} : memref<1x8x128xf32, #tpu.memory_space<vmem>>, vector<1x8x128xf32>,
      %c0_44 = arith.constant 0 : index
      %c0_45 = arith.constant 0 : index
      %69 = vector.load %arg10[%c0_44, %c0_45] : memref<8x1xf32, #tpu.memory_space<vmem>>, vector<8x1xf32>
      %70 = vector.shape_cast %69 : vector<8x1xf32> to vector<1x8x1xf32>
      %cst_46 = arith.constant dense<0.000000e+00> : vector<1xf32>
      %71 = vector.multi_reduction <add>, %70, %cst_46 [1, 2] : vector<1x8x1xf32> to vector<1xf32>
      %72 = vector.shape_cast %71 : vector<1xf32> to vector<1x1x1xf32>
      %73 = vector.extract %72[0, 0, 0] : f32 from vector<1x1x1xf32>
      %74 = vector.broadcast %73 : f32 to vector<1x8x128xf32>
      %c0_47 = arith.constant 0 : index
      %c0_48 = arith.constant 0 : index
      %c0_49 = arith.constant 0 : index
      %75 = vector.load %arg6[%c0_47, %c0_48, %c0_49] : memref<1x8x128xf32, #tpu.memory_space<vmem>>, vector<1x8x128xf32>
      tpu.vector_store %arg6[%c0_47, %c0_48, %c0_49], %74 {strides = array<i32>} : memref<1x8x128xf32, #tpu.memory_space<vmem>>, vector<1x8x128xf32>,
    } else {
    }
    return
  }
  func.func @transform_0(%arg0: i32, %arg1: i32) -> (i32, i32) {
    %c0_i32 = arith.constant 0 : i32
    return %arg0, %arg1 : i32, i32
  }
  func.func @transform_1(%arg0: i32, %arg1: i32) -> (i32, i32) {
    %c0_i32 = arith.constant 0 : i32
    %c0_i32_0 = arith.constant 0 : i32
    return %arg0, %c0_i32 : i32, i32
  }
  func.func @transform_2(%arg0: i32, %arg1: i32) -> (i32, i32) {
    %c0_i32 = arith.constant 0 : i32
    %c0_i32_0 = arith.constant 0 : i32
    return %c0_i32, %arg1 : i32, i32
  }
  func.func @transform_3(%arg0: i32, %arg1: i32) -> (i32, i32, i32) {
    %c0_i32 = arith.constant 0 : i32
    %c0_i32_0 = arith.constant 0 : i32
    %c0_i32_1 = arith.constant 0 : i32
    return %arg0, %c0_i32, %c0_i32_0 : i32, i32, i32
  }
  func.func @transform_4(%arg0: i32, %arg1: i32) -> (i32, i32, i32) {
    %c0_i32 = arith.constant 0 : i32
    %c0_i32_0 = arith.constant 0 : i32
    %c0_i32_1 = arith.constant 0 : i32
    return %arg0, %c0_i32, %c0_i32_0 : i32, i32, i32
  }
}

</mosaic_0001>

<llo_original>
// kernel: tpu_custom_call.1
$region0: #{tpu_custom_call.1}
  #allocation0 [shape = 'u32[]', space=smem, size = 0x4, offset = 0x4, fixed_abs, tag = 'smem constant byte address 0x4 - core index']
  #allocation1 [shape = 'u32[144,128]{1,0:T(1,128)}', space=vmem, size = 0x12000, scoped, tag = 'internal scratch']
  #allocation2 [shape = 'f32[8,1]{1,0:T(8,128)}', space=vmem, size = 0x1000, scoped, tag = 'scratch operand']
  #allocation3 [shape = 'f32[8,1]{1,0:T(8,128)}', space=vmem, size = 0x1000, scoped, tag = 'scratch operand']
  #allocation4 [shape = 'f32[8,1]{1,0:T(8,128)}', space=vmem, size = 0x1000, scoped, tag = 'scratch operand']
  #allocation5 [shape = 'f32[8,1]{1,0:T(8,128)}', space=vmem, size = 0x1000, scoped, tag = 'scratch operand']
  %s0 = inlined_call_operand.vmem [shape: f32[8,32], index: 0, kind: input, shape index: {}]
  %s1 = inlined_call_operand.vmem [shape: s32[8,1], index: 1, kind: input, shape index: {}]
  %s2 = inlined_call_operand.vmem [shape: f32[1,128], index: 2, kind: input, shape index: {}]
  %s3 = inlined_call_operand.hbm [shape: f32[1,8,128], index: 3, kind: output, shape index: {0}]
  %s4 = inlined_call_operand.hbm [shape: f32[1,8,128], index: 4, kind: output, shape index: {1}]
  %5 = xla_tuple %s3, %s4
  %s6 = sld [smem:[#allocation0]]
  $region38: #{tpu_custom_call.1} parent=0
    _
  %s8 = ssub.s32 1, %s6
  %s9 = scalar_select 0, %s8, %s6
  $region1: #{tpu_custom_call.1} parent=0
    #allocation6 [shape = 'u8[4096]{0}', space=vmem, size = 0x1000, scoped, tag = 'output window, operand 0, single buffered']
    #allocation7 [shape = 's32[1]{0}', space=sflag, size = 0x4, scoped, tag = 'scoped memory for tpu_custom_call.1']
    #allocation8 [shape = 'u8[4096]{0}', space=vmem, size = 0x1000, scoped, tag = 'output window, operand 1, single buffered']
    #allocation9 [shape = 's32[1]{0}', space=sflag, size = 0x4, scoped, tag = 'scoped memory for tpu_custom_call.1']
    %10 = vsyncpa [#allocation7], 0
    %11 = vsyncpa [#allocation9], 0
    // Predicated region
    $region2: #{tpu_custom_call.1} parent=1 // pred_check
      _
    $region3: #{tpu_custom_call.1} parent=1 // pred_check_branch
      %13 = sbr.rel (0) target = $region5
    $region4: #{tpu_custom_call.1} parent=1 // pred_region
      _
    $region5: #{tpu_custom_call.1} parent=1 // pred_fallthru
      _
    // Predicated region
    $region6: #{tpu_custom_call.1} parent=1 // pred_check
      _
    $region7: #{tpu_custom_call.1} parent=1 // pred_check_branch
      %15 = sbr.rel (0) target = $region9
    $region8: #{tpu_custom_call.1} parent=1 // pred_region
      _
    $region9: #{tpu_custom_call.1} parent=1 // pred_fallthru
      _
    // Predicated region
    $region10: #{tpu_custom_call.1} parent=1 // pred_check
      _
    $region11: #{tpu_custom_call.1} parent=1 // pred_check_branch
      %17 = sbr.rel (0) target = $region13
    $region12: #{tpu_custom_call.1} parent=1 // pred_region
      _
    $region13: #{tpu_custom_call.1} parent=1 // pred_fallthru
      _
    %p18 = scmp.eq.s32.totalorder 0, 0
    // Predicated region
    $region14: #{tpu_custom_call.1} parent=1 // pred_check
      %p19 = pneg %p18
    $region15: #{tpu_custom_call.1} parent=1 // pred_check_branch
      %21 = sbr.rel (%p19) target = $region17
    $region16: #{tpu_custom_call.1} parent=1 // pred_region
      %vm22 = vcmask 7168
      %23 = vst.msk [vmem:[#allocation2] sm:$0xff] %vm22, -1e+30
      %24 = vst.msk [vmem:[#allocation3] sm:$0xff] %vm22, 0.0
      %25 = vst.msk [vmem:[#allocation4] sm:$0xff] %vm22, 0.0
      %26 = vst.msk [vmem:[#allocation5] sm:$0xff] %vm22, 0.0
    $region17: #{tpu_custom_call.1} parent=1 // pred_fallthru
      _
    %v27 = vld [vmem:[%s0] sm:$0xff]
    %v28 = vld [vmem:[%s1] sm:$0xff]
    %v29 = vld [vmem:[%s2] sm:$0x1]
    %s30 = smul.u32 0, 128
    %v31 = vlaneseq
    %v32 = vand.u32 %v31, 127
    %v33 = vstv %s30
    %v34 = vadd.s32 %v33, %v32
    %vm35 = vcmp.lt.s32.totalorder %v34, 32
    %v36 = vsel %vm35, 1, 0
    %vm37 = vcmp.eq.s32.totalorder %v36, 1
    %v38 = vsel %vm37, %v27, -1e+30
    %39 = vmax.xlane.f32.xlu0 %v38
    %v40 = vpop.xlane.xlu0 %39
    %v41 = vld [vmem:[#allocation2] sm:$0xff]
    %v42 = vmax.f32 %v41, %v40
    %v43 = vsub.f32 %v41, %v42
    %v44 = vmul.f32 %v43, 1.442695
    %v45 = vpow.pop %v44
    %47 = vset.pattern.permute.xlu0 0
    %48 = vperm.xlu0 %47, %v42
    %v49 = vpop.permute.xlu0 %48
    %v51 = vsub.f32 %v38, %v49
    %v52 = vmul.f32 %v51, 1.442695
    %v53 = vpow.pop %v52
    %v54 = vld [vmem:[#allocation3] sm:$0xff]
    %v55 = vmul.f32 %v45, %v54
    %56 = vadd.xlane.f32.xlu0 %v53
    %v57 = vpop.xlane.xlu0 %56
    %v58 = vadd.f32 %v55, %v57
    %vm59 = vcmask 7168
    %60 = vst.msk [vmem:[#allocation3] sm:$0xff] %vm59, %v58
    %61 = vst.msk [vmem:[#allocation2] sm:$0xff] %vm59, %v42
    %62 = vset.pattern.permute.xlu0 0
    %63 = vperm.xlu0 %62, %v28
    %v64 = vpop.permute.xlu0 %63
    %vm65 = vcmp.eq.s32.totalorder %v34, %v64
    %v66 = vld [vmem:[#allocation4] sm:$0xff]
    %v67 = vsel %vm65, %v38, 0.0
    %68 = vadd.xlane.f32.xlu0 %v67
    %v69 = vpop.xlane.xlu0 %68
    %v70 = vadd.f32 %v66, %v69
    %71 = vst.msk [vmem:[#allocation4] sm:$0xff] %vm59, %v70
    %v72 = vld [vmem:[#allocation5] sm:$0xff]
    %v74 = vlaneseq
    %v75 = vshrl.u32 %v74, 7
    %v76 = vsub.s32 0, %v75
    %v77 = vrot.slane %v29, %v76
    %v79 = vsel %vm65, %v77, 0.0
    %80 = vadd.xlane.f32.xlu0 %v79
    %v81 = vpop.xlane.xlu0 %80
    %v82 = vadd.f32 %v72, %v81
    %83 = vst.msk [vmem:[#allocation5] sm:$0xff] %vm59, %v82
    // Predicated region
    $region18: #{tpu_custom_call.1} parent=1 // pred_check
      %p84 = pneg %p18
    $region19: #{tpu_custom_call.1} parent=1 // pred_check_branch
      %86 = sbr.rel (%p84) target = $region21
    $region20: #{tpu_custom_call.1} parent=1 // pred_region
      %v87 = vld [vmem:[#allocation2] sm:$0xff]
      %v88 = vld [vmem:[#allocation3] sm:$0xff]
      %v89 = vlog2.pop %v88
      %v90 = vmul.f32 %v89, 0.6931472
      %v91 = vadd.f32 %v87, %v90
      %v92 = vld [vmem:[#allocation4] sm:$0xff]
      %v93 = vsub.f32 %v91, %v92
      %v94 = vld [vmem:[#allocation5] sm:$0xff]
      %v95 = vmul.f32 %v93, %v94
      %v96 = vsel %vm59, %v95, 0.0
      %97 = vadd.xlane.f32.xlu0 %v96
      %v98 = vpop.xlane.xlu0 %97
      %v99 = vrot.slane %v98, 4
      %v100 = vadd.f32 %v98, %v99
      %v101 = vrot.slane %v100, 2
      %v102 = vadd.f32 %v100, %v101
      %v103 = vrot.slane %v102, 1
      %v104 = vadd.f32 %v102, %v103
      %s105 = vtos %v104
      %v106 = vstv %s105
      %107 = vst [vmem:[#allocation6] sm:$0xff] %v106
      %v108 = vld [vmem:[#allocation5] sm:$0xff]
      %v109 = vsel %vm59, %v108, 0.0
      %110 = vadd.xlane.f32.xlu0 %v109
      %v111 = vpop.xlane.xlu0 %110
      %v112 = vrot.slane %v111, 4
      %v113 = vadd.f32 %v111, %v112
      %v114 = vrot.slane %v113, 2
      %v115 = vadd.f32 %v113, %v114
      %v116 = vrot.slane %v115, 1
      %v117 = vadd.f32 %v115, %v116
      %s118 = vtos %v117
      %v119 = vstv %s118
      %120 = vst [vmem:[#allocation8] sm:$0xff] %v119
    $region21: #{tpu_custom_call.1} parent=1 // pred_fallthru
      _
    // Predicated region
    $region22: #{tpu_custom_call.1} parent=1 // pred_check
      _
    $region23: #{tpu_custom_call.1} parent=1 // pred_check_branch
      %122 = sbr.rel (0) target = $region25
    $region24: #{tpu_custom_call.1} parent=1 // pred_region
      %s124 = ssub.s32 128, 128
      %125 = vsyncadd [#allocation7], %s124
      %s127 = sshll.u32 [#allocation6], 4
      %s128 = int_to_ptr.vmem [resolvable:$true] %s127
      %130 = dma.vmem_to_hbm [thread:$0]  %s128, 128, %s3, [#allocation7]
    $region25: #{tpu_custom_call.1} parent=1 // pred_fallthru
      _
    // Predicated region
    $region26: #{tpu_custom_call.1} parent=1 // pred_check
      _
    $region27: #{tpu_custom_call.1} parent=1 // pred_check_branch
      %132 = sbr.rel (0) target = $region29
    $region28: #{tpu_custom_call.1} parent=1 // pred_region
      %s134 = ssub.s32 128, 128
      %135 = vsyncadd [#allocation9], %s134
      %s137 = sshll.u32 [#allocation8], 4
      %s138 = int_to_ptr.vmem [resolvable:$true] %s137
      %140 = dma.vmem_to_hbm [thread:$0]  %s138, 128, %s4, [#allocation9]
    $region29: #{tpu_custom_call.1} parent=1 // pred_fallthru
      _
    // Predicated region
    $region30: #{tpu_custom_call.1} parent=1 // pred_check
      _
    $region31: #{tpu_custom_call.1} parent=1 // pred_check_branch
      %142 = sbr.rel (0) target = $region33
    $region32: #{tpu_custom_call.1} parent=1 // pred_region
      %143 = dma.done [#allocation7], 128
    $region33: #{tpu_custom_call.1} parent=1 // pred_fallthru
      _
    // Predicated region
    $region34: #{tpu_custom_call.1} parent=1 // pred_check
      _
    $region35: #{tpu_custom_call.1} parent=1 // pred_check_branch
      %145 = sbr.rel (0) target = $region37
    $region36: #{tpu_custom_call.1} parent=1 // pred_region
      %146 = dma.done [#allocation9], 128
    $region37: #{tpu_custom_call.1} parent=1 // pred_fallthru
      _
    %147 = vsyncpa [#allocation7], 1
    %148 = vsyncpa [#allocation9], 1

</llo_original>
